<compile_context>
chip_gen: v7x
topology: tpu7x:2x2x1
jax: 0.10.0
libtpu: 0.0.40
codegen_flags: <defaults>
</compile_context>

<pallas_src>
from functools import partial

import jax
import jax.numpy as jnp
from jax import lax
from jax.experimental import pallas as pl
from jax.experimental.pallas import tpu as pltpu

EPS = 1e-5
LANE = 128
H1 = 256   # fc1 output features
H2 = 128   # fc2 output features


def classifier_kernel(x_ref, w1_ref, w23_ref, p_ref, o_ref):
    """Fused fc1 -> BN1 -> ReLU -> fc2 -> BN2 -> ReLU -> fc3 (padded).

    x_ref   : [B, latent_dim]                       f32
    w1_ref  : [latent_dim, H1]                      f32
    w23_ref : [H1 + H2, 128]  rows 0:H1 = w2, rows H1: = zero-padded w3
    p_ref   : [5, H1] per-feature param slab:
                row 0: gamma1   row 1: beta1        (width H1)
                row 2: gamma2   row 3: beta2        (cols 0:H2)
                row 4: padded fc3 bias              (cols 0:LANE)
    o_ref   : [B, LANE] lane-dense padded logits
    """
    B = x_ref.shape[0]
    inv_b = 1.0 / B

    def bn_relu(h, gamma, beta):
        # Single-pass batch stats: E[h], E[h^2] -> biased variance.
        mu = jnp.sum(h, axis=0, keepdims=True) * inv_b
        ex2 = jnp.sum(h * h, axis=0, keepdims=True) * inv_b
        var = jnp.maximum(ex2 - mu * mu, 0.0)         # guard f32 cancellation
        # Fold BN into one per-feature scale/shift, fused with ReLU.
        scale = gamma * lax.rsqrt(var + EPS)          # EUP rsqrt (free slot)
        shift = beta - mu * scale
        return jnp.maximum(h * scale + shift, 0.0)

    # ---- fc1 (bias cancelled by BN mean subtraction) + bn1 + relu ----
    h = jnp.dot(x_ref[...], w1_ref[...], preferred_element_type=jnp.float32)
    h = bn_relu(h, p_ref[0:1, :], p_ref[1:2, :])

    # ---- fc2 (bias cancelled) + bn2 + relu ----
    h = jnp.dot(h, w23_ref[0:H1, :], preferred_element_type=jnp.float32)
    h = bn_relu(h, p_ref[2:3, 0:H2], p_ref[3:4, 0:H2])

    # ---- fc3 (lane-dense padded output, unmasked full-width store) ----
    logits = (jnp.dot(h, w23_ref[H1:H1 + H2, :],
                      preferred_element_type=jnp.float32)
              + p_ref[4:5, 0:LANE])
    o_ref[...] = logits.astype(o_ref.dtype)


def pack_params(params):
    """One-time packing of PyTorch-equivalent params into kernel slabs.

    params = (w1, b1, g1, be1, w2, b2, g2, be2, w3, b3) with weights already
    transposed to [in, out] and biases / BN params shaped [1, F].
    Returns (w1, w23_slab, param_slab, num_classes).
    """
    (w1, b1, g1, be1, w2, b2, g2, be2, w3, b3) = params
    del b1, b2  # exactly cancelled by training-mode BatchNorm mean subtraction

    num_classes = w3.shape[1]
    assert num_classes <= LANE, "packed fc3 path assumes num_classes <= 128"
    assert w1.shape[1] == H1 and w2.shape == (H1, H2) and w3.shape[0] == H2

    # w2 / padded-w3 slab: [H1 + H2, LANE]
    w3p = jnp.zeros((H2, LANE), w3.dtype).at[:, :num_classes].set(w3)
    w23 = jnp.concatenate([w2.astype(jnp.float32), w3p.astype(jnp.float32)],
                          axis=0)

    # Per-feature param slab: [5, H1]
    p = jnp.zeros((5, H1), jnp.float32)
    p = p.at[0:1, :].set(g1).at[1:2, :].set(be1)
    p = p.at[2:3, :H2].set(g2).at[3:4, :H2].set(be2)
    p = p.at[4:5, :num_classes].set(b3)

    return (w1.astype(jnp.float32), w23, p, num_classes)


@partial(jax.jit, static_argnames=("num_classes",))
def classifier_forward(x, w1, w23, pslab, *, num_classes):
    """Hot path: one pallas_call (4 inputs) + slice, all inside one jit."""
    B = x.shape[0]
    vmem = pl.BlockSpec(memory_space=pltpu.MemorySpace.VMEM)
    out = pl.pallas_call(
        classifier_kernel,
        out_shape=jax.ShapeDtypeStruct((B, LANE), jnp.float32),
        in_specs=[vmem] * 4,
        out_specs=vmem,
    )(x, w1, w23, pslab)
    return out[:, :num_classes]


def _init_linear(key, fan_in, fan_out):
    # PyTorch nn.Linear default init: U(-1/sqrt(fan_in), 1/sqrt(fan_in))
    kw, kb = jax.random.split(key)
    bound = 1.0 / jnp.sqrt(fan_in)
    w = jax.random.uniform(kw, (fan_in, fan_out), jnp.float32, -bound, bound)
    b = jax.random.uniform(kb, (1, fan_out), jnp.float32, -bound, bound)
    return w, b


def reference_forward(x, params):
    """Plain-JAX reference with full PyTorch semantics (incl. fc biases)."""
    (w1, b1, g1, be1, w2, b2, g2, be2, w3, b3) = params

    def bn(h, g, be):
        mu = jnp.mean(h, axis=0, keepdims=True)
        var = jnp.mean((h - mu) ** 2, axis=0, keepdims=True)  # biased variance
        return (h - mu) / jnp.sqrt(var + EPS) * g + be

    h = jnp.maximum(bn(x @ w1 + b1, g1, be1), 0.0)
    h = jnp.maximum(bn(h @ w2 + b2, g2, be2), 0.0)
    return h @ w3 + b3


if __name__ == "__main__":
    B, latent_dim, num_classes = 8, 32, 10

    key = jax.random.PRNGKey(0)
    k_x, k1, k2, k3 = jax.random.split(key, 4)

    x = jax.random.normal(k_x, (B, latent_dim), jnp.float32)

    w1, b1 = _init_linear(k1, latent_dim, H1)
    w2, b2 = _init_linear(k2, H1, H2)
    w3, b3 = _init_linear(k3, H2, num_classes)
    # BatchNorm1d default affine params: weight=1, bias=0
    g1, be1 = jnp.ones((1, H1), jnp.float32), jnp.zeros((1, H1), jnp.float32)
    g2, be2 = jnp.ones((1, H2), jnp.float32), jnp.zeros((1, H2), jnp.float32)

    params = (w1, b1, g1, be1, w2, b2, g2, be2, w3, b3)

    # Packing hoisted out of the forward path: done once at init.
    w1_p, w23_p, pslab, nc = pack_params(params)

    out = classifier_forward(x, w1_p, w23_p, pslab, num_classes=nc)
    out = jax.block_until_ready(out)

    ref = reference_forward(x, params)
    assert out.shape == (B, num_classes)
    assert jnp.allclose(out, ref, atol=1e-4, rtol=1e-4), "mismatch vs JAX reference"

    print("KERNEL_OK")
</pallas_src>

<mosaic_0001>
module attributes {stable_mosaic.version = 11 : i64} {
  func.func @classifier_kernel(%arg0: memref<8x32xf32, #tpu.memory_space<vmem>>, %arg1: memref<32x256xf32, #tpu.memory_space<vmem>>, %arg2: memref<384x128xf32, #tpu.memory_space<vmem>>, %arg3: memref<5x256xf32, #tpu.memory_space<vmem>>, %arg4: memref<8x128xf32, #tpu.memory_space<vmem>>) attributes {dimension_semantics = [], scalar_prefetch = 0 : i64, scratch_operands = 0 : i64, tpu.core_type = #tpu.core_type<tc>} {
    %c0 = arith.constant 0 : index
    %c0_0 = arith.constant 0 : index
    %0 = vector.load %arg0[%c0, %c0_0] : memref<8x32xf32, #tpu.memory_space<vmem>>, vector<8x32xf32>
    %c0_1 = arith.constant 0 : index
    %c0_2 = arith.constant 0 : index
    %1 = vector.load %arg1[%c0_1, %c0_2] : memref<32x256xf32, #tpu.memory_space<vmem>>, vector<32x256xf32>
    %cst = arith.constant dense<0.000000e+00> : vector<8x256xf32>
    %2 = tpu.matmul %0, %1, %cst {dimension_numbers = #tpu.dot_dimension_numbers<[1], [0], [0], [1], [0, 0, 1, 1], [], []>} : vector<8x32xf32>, vector<32x256xf32>, vector<8x256xf32> -> vector<8x256xf32>
    %c0_3 = arith.constant 0 : index
    %c0_4 = arith.constant 0 : index
    %3 = vector.load %arg3[%c0_3, %c0_4] : memref<5x256xf32, #tpu.memory_space<vmem>>, vector<1x256xf32>
    %c1 = arith.constant 1 : index
    %c0_5 = arith.constant 0 : index
    %4 = vector.load %arg3[%c1, %c0_5] : memref<5x256xf32, #tpu.memory_space<vmem>>, vector<1x256xf32>
    %cst_6 = arith.constant dense<0.000000e+00> : vector<256xf32>
    %5 = vector.multi_reduction <add>, %2, %cst_6 [0] : vector<8x256xf32> to vector<256xf32>
    %6 = vector.shape_cast %5 : vector<256xf32> to vector<1x256xf32>
    %cst_7 = arith.constant 1.250000e-01 : f32
    %7 = vector.broadcast %cst_7 : f32 to vector<1x256xf32>
    %8 = arith.mulf %6, %7 : vector<1x256xf32>
    %9 = arith.mulf %2, %2 : vector<8x256xf32>
    %cst_8 = arith.constant dense<0.000000e+00> : vector<256xf32>
    %10 = vector.multi_reduction <add>, %9, %cst_8 [0] : vector<8x256xf32> to vector<256xf32>
    %11 = vector.shape_cast %10 : vector<256xf32> to vector<1x256xf32>
    %cst_9 = arith.constant 1.250000e-01 : f32
    %12 = vector.broadcast %cst_9 : f32 to vector<1x256xf32>
    %13 = arith.mulf %11, %12 : vector<1x256xf32>
    %14 = arith.mulf %8, %8 : vector<1x256xf32>
    %15 = arith.subf %13, %14 : vector<1x256xf32>
    %cst_10 = arith.constant 0.000000e+00 : f32
    %16 = vector.broadcast %cst_10 : f32 to vector<1x256xf32>
    %17 = arith.maximumf %15, %16 : vector<1x256xf32>
    %cst_11 = arith.constant 9.99999974E-6 : f32
    %18 = vector.broadcast %cst_11 : f32 to vector<1x256xf32>
    %19 = arith.addf %17, %18 : vector<1x256xf32>
    %20 = math.rsqrt %19 : vector<1x256xf32>
    %21 = arith.mulf %3, %20 : vector<1x256xf32>
    %22 = arith.mulf %8, %21 : vector<1x256xf32>
    %23 = arith.subf %4, %22 : vector<1x256xf32>
    %24 = vector.broadcast %21 : vector<1x256xf32> to vector<8x256xf32>
    %25 = arith.mulf %2, %24 : vector<8x256xf32>
    %26 = vector.broadcast %23 : vector<1x256xf32> to vector<8x256xf32>
    %27 = arith.addf %25, %26 : vector<8x256xf32>
    %cst_12 = arith.constant 0.000000e+00 : f32
    %28 = vector.broadcast %cst_12 : f32 to vector<8x256xf32>
    %29 = arith.maximumf %27, %28 : vector<8x256xf32>
    %c0_13 = arith.constant 0 : index
    %c0_14 = arith.constant 0 : index
    %30 = vector.load %arg2[%c0_13, %c0_14] : memref<384x128xf32, #tpu.memory_space<vmem>>, vector<256x128xf32>
    %cst_15 = arith.constant dense<0.000000e+00> : vector<8x128xf32>
    %31 = tpu.matmul %29, %30, %cst_15 {dimension_numbers = #tpu.dot_dimension_numbers<[1], [0], [0], [1], [0, 0, 1, 1], [], []>} : vector<8x256xf32>, vector<256x128xf32>, vector<8x128xf32> -> vector<8x128xf32>
    %c2 = arith.constant 2 : index
    %c0_16 = arith.constant 0 : index
    %32 = vector.load %arg3[%c2, %c0_16] : memref<5x256xf32, #tpu.memory_space<vmem>>, vector<1x128xf32>
    %c3 = arith.constant 3 : index
    %c0_17 = arith.constant 0 : index
    %33 = vector.load %arg3[%c3, %c0_17] : memref<5x256xf32, #tpu.memory_space<vmem>>, vector<1x128xf32>
    %cst_18 = arith.constant dense<0.000000e+00> : vector<128xf32>
    %34 = vector.multi_reduction <add>, %31, %cst_18 [0] : vector<8x128xf32> to vector<128xf32>
    %35 = vector.shape_cast %34 : vector<128xf32> to vector<1x128xf32>
    %cst_19 = arith.constant 1.250000e-01 : f32
    %36 = vector.broadcast %cst_19 : f32 to vector<1x128xf32>
    %37 = arith.mulf %35, %36 : vector<1x128xf32>
    %38 = arith.mulf %31, %31 : vector<8x128xf32>
    %cst_20 = arith.constant dense<0.000000e+00> : vector<128xf32>
    %39 = vector.multi_reduction <add>, %38, %cst_20 [0] : vector<8x128xf32> to vector<128xf32>
    %40 = vector.shape_cast %39 : vector<128xf32> to vector<1x128xf32>
    %cst_21 = arith.constant 1.250000e-01 : f32
    %41 = vector.broadcast %cst_21 : f32 to vector<1x128xf32>
    %42 = arith.mulf %40, %41 : vector<1x128xf32>
    %43 = arith.mulf %37, %37 : vector<1x128xf32>
    %44 = arith.subf %42, %43 : vector<1x128xf32>
    %cst_22 = arith.constant 0.000000e+00 : f32
    %45 = vector.broadcast %cst_22 : f32 to vector<1x128xf32>
    %46 = arith.maximumf %44, %45 : vector<1x128xf32>
    %cst_23 = arith.constant 9.99999974E-6 : f32
    %47 = vector.broadcast %cst_23 : f32 to vector<1x128xf32>
    %48 = arith.addf %46, %47 : vector<1x128xf32>
    %49 = math.rsqrt %48 : vector<1x128xf32>
    %50 = arith.mulf %32, %49 : vector<1x128xf32>
    %51 = arith.mulf %37, %50 : vector<1x128xf32>
    %52 = arith.subf %33, %51 : vector<1x128xf32>
    %53 = vector.broadcast %50 : vector<1x128xf32> to vector<8x128xf32>
    %54 = arith.mulf %31, %53 : vector<8x128xf32>
    %55 = vector.broadcast %52 : vector<1x128xf32> to vector<8x128xf32>
    %56 = arith.addf %54, %55 : vector<8x128xf32>
    %cst_24 = arith.constant 0.000000e+00 : f32
    %57 = vector.broadcast %cst_24 : f32 to vector<8x128xf32>
    %58 = arith.maximumf %56, %57 : vector<8x128xf32>
    %c256 = arith.constant 256 : index
    %c0_25 = arith.constant 0 : index
    %59 = vector.load %arg2[%c256, %c0_25] : memref<384x128xf32, #tpu.memory_space<vmem>>, vector<128x128xf32>
    %cst_26 = arith.constant dense<0.000000e+00> : vector<8x128xf32>
    %60 = tpu.matmul %58, %59, %cst_26 {dimension_numbers = #tpu.dot_dimension_numbers<[1], [0], [0], [1], [0, 0, 1, 1], [], []>} : vector<8x128xf32>, vector<128x128xf32>, vector<8x128xf32> -> vector<8x128xf32>
    %c4 = arith.constant 4 : index
    %c0_27 = arith.constant 0 : index
    %61 = vector.load %arg3[%c4, %c0_27] : memref<5x256xf32, #tpu.memory_space<vmem>>, vector<1x128xf32>
    %62 = vector.broadcast %61 : vector<1x128xf32> to vector<8x128xf32>
    %63 = arith.addf %60, %62 : vector<8x128xf32>
    %c0_28 = arith.constant 0 : index
    %c0_29 = arith.constant 0 : index
    %64 = vector.load %arg4[%c0_28, %c0_29] : memref<8x128xf32, #tpu.memory_space<vmem>>, vector<8x128xf32>
    tpu.vector_store %arg4[%c0_28, %c0_29], %63 {strides = array<i32>} : memref<8x128xf32, #tpu.memory_space<vmem>>, vector<8x128xf32>,
    return
  }
}

</mosaic_0001>

<llo_original>
// kernel: classifier_forward.1
$region0: #{classifier_forward.1}
  #allocation0 [shape = 'u32[]', space=smem, size = 0x4, offset = 0x4, fixed_abs, tag = 'smem constant byte address 0x4 - core index']
  #allocation1 [shape = 'u32[144,128]{1,0:T(1,128)}', space=vmem, size = 0x12000, scoped, tag = 'internal scratch']
  %s0 = inlined_call_operand.hbm [shape: f32[8,32], index: 0, kind: input, shape index: {}]
  %s1 = inlined_call_operand.hbm [shape: f32[32,256], index: 1, kind: input, shape index: {}]
  %s2 = inlined_call_operand.hbm [shape: f32[384,128], index: 2, kind: input, shape index: {}]
  %s3 = inlined_call_operand.hbm [shape: f32[5,256], index: 3, kind: input, shape index: {}]
  %s4 = inlined_call_operand.hbm [shape: f32[8,128], index: 4, kind: output, shape index: {}]
  %s5 = sld [smem:[#allocation0]]
  $region42: #{classifier_forward.1} parent=0
    _
  %s7 = ssub.s32 1, %s5
  %s8 = scalar_select 0, %s7, %s5
  $region1: #{classifier_forward.1} parent=0
    #allocation2 [shape = 'u8[4096]{0}', space=vmem, size = 0x1000, scoped, tag = 'input window, operand 0, single buffered']
    #allocation3 [shape = 's32[1]{0}', space=sflag, size = 0x4, scoped, tag = 'scoped memory for classifier_forward.1']
    #allocation4 [shape = 's32[1]{0}', space=sflag, size = 0x4, scoped, tag = 'scoped memory for classifier_forward.1']
    #allocation5 [shape = 'u8[32768]{0}', space=vmem, size = 0x8000, scoped, tag = 'input window, operand 1, single buffered']
    #allocation6 [shape = 's32[1]{0}', space=sflag, size = 0x4, scoped, tag = 'scoped memory for classifier_forward.1']
    #allocation7 [shape = 'u8[196608]{0}', space=vmem, size = 0x30000, scoped, tag = 'input window, operand 2, single buffered']
    #allocation8 [shape = 'u8[8192]{0}', space=vmem, size = 0x2000, scoped, tag = 'input window, operand 3, single buffered']
    #allocation9 [shape = 's32[1]{0}', space=sflag, size = 0x4, scoped, tag = 'scoped memory for classifier_forward.1']
    #allocation10 [shape = 'u8[4096]{0}', space=vmem, size = 0x1000, scoped, tag = 'output window, operand 0, single buffered']
    %9 = vsyncpa [#allocation3], 0
    %10 = vsyncpa [#allocation6], 0
    %11 = vsyncpa [#allocation9], 0
    %12 = vsyncpa [#allocation4], 0
    // Predicated region
    $region2: #{classifier_forward.1} parent=1 // pred_check
      _
    $region3: #{classifier_forward.1} parent=1 // pred_check_branch
      %14 = sbr.rel (0) target = $region5
    $region4: #{classifier_forward.1} parent=1 // pred_region
      %s16 = ssub.s32 128, 128
      %17 = vsyncadd [#allocation3], %s16
      %s19 = sshll.u32 [#allocation2], 4
      %s20 = int_to_ptr.vmem [resolvable:$true] %s19
      %22 = dma.hbm_to_vmem [thread:$0]  %s0, 128, %s20, [#allocation3]
    $region5: #{classifier_forward.1} parent=1 // pred_fallthru
      _
    // Predicated region
    $region6: #{classifier_forward.1} parent=1 // pred_check
      _
    $region7: #{classifier_forward.1} parent=1 // pred_check_branch
      %24 = sbr.rel (0) target = $region9
    $region8: #{classifier_forward.1} parent=1 // pred_region
      %s26 = ssub.s32 1024, 1024
      %27 = vsyncadd [#allocation6], %s26
      %s28 = sshll.u32 [#allocation5], 4
      %s29 = int_to_ptr.vmem [resolvable:$true] %s28
      %34 = dma.hbm_to_vmem [thread:$0]  %s1, 1024, %s29, [#allocation6], 256, 256, 16
    $region9: #{classifier_forward.1} parent=1 // pred_fallthru
      _
    // Predicated region
    $region10: #{classifier_forward.1} parent=1 // pred_check
      _
    $region11: #{classifier_forward.1} parent=1 // pred_check_branch
      %36 = sbr.rel (0) target = $region13
    $region12: #{classifier_forward.1} parent=1 // pred_region
      %s38 = ssub.s32 6144, 6144
      %39 = vsyncadd [#allocation6], %s38
      %s40 = sshll.u32 [#allocation7], 4
      %s41 = int_to_ptr.vmem [resolvable:$true] %s40
      %46 = dma.hbm_to_vmem [thread:$0]  %s2, 6144, %s41, [#allocation6], 128, 128, 8
    $region13: #{classifier_forward.1} parent=1 // pred_fallthru
      _
    // Predicated region
    $region14: #{classifier_forward.1} parent=1 // pred_check
      _
    $region15: #{classifier_forward.1} parent=1 // pred_check_branch
      %48 = sbr.rel (0) target = $region17
    $region16: #{classifier_forward.1} parent=1 // pred_region
      %s50 = ssub.s32 256, 256
      %51 = vsyncadd [#allocation9], %s50
      %s53 = sshll.u32 [#allocation8], 4
      %s54 = int_to_ptr.vmem [resolvable:$true] %s53
      %56 = dma.hbm_to_vmem [thread:$0]  %s3, 256, %s54, [#allocation9]
    $region17: #{classifier_forward.1} parent=1 // pred_fallthru
      _
    // Predicated region
    $region18: #{classifier_forward.1} parent=1 // pred_check
      _
    $region19: #{classifier_forward.1} parent=1 // pred_check_branch
      %58 = sbr.rel (0) target = $region21
    $region20: #{classifier_forward.1} parent=1 // pred_region
      %59 = dma.done [#allocation3], 128
    $region21: #{classifier_forward.1} parent=1 // pred_fallthru
      _
    // Predicated region
    $region22: #{classifier_forward.1} parent=1 // pred_check
      _
    $region23: #{classifier_forward.1} parent=1 // pred_check_branch
      %61 = sbr.rel (0) target = $region25
    $region24: #{classifier_forward.1} parent=1 // pred_region
      %62 = dma.done [#allocation6], 1024
    $region25: #{classifier_forward.1} parent=1 // pred_fallthru
      _
    // Predicated region
    $region26: #{classifier_forward.1} parent=1 // pred_check
      _
    $region27: #{classifier_forward.1} parent=1 // pred_check_branch
      %64 = sbr.rel (0) target = $region29
    $region28: #{classifier_forward.1} parent=1 // pred_region
      %65 = dma.done [#allocation6], 6144
    $region29: #{classifier_forward.1} parent=1 // pred_fallthru
      _
    // Predicated region
    $region30: #{classifier_forward.1} parent=1 // pred_check
      _
    $region31: #{classifier_forward.1} parent=1 // pred_check_branch
      %67 = sbr.rel (0) target = $region33
    $region32: #{classifier_forward.1} parent=1 // pred_region
      %68 = dma.done [#allocation9], 256
    $region33: #{classifier_forward.1} parent=1 // pred_fallthru
      _
    %v69 = vld [vmem:[#allocation2] sm:$0xff]
    %v70 = vld [vmem:[#allocation5] sm:$0xff]
    %v71 = vld [vmem:[#allocation5 + $0x8] sm:$0xff]
    %v72 = vld [vmem:[#allocation5 + $0x10] sm:$0xff]
    %v73 = vld [vmem:[#allocation5 + $0x18] sm:$0xff]
    %v74 = vld [vmem:[#allocation5 + $0x20] sm:$0xff]
    %v75 = vld [vmem:[#allocation5 + $0x28] sm:$0xff]
    %v76 = vld [vmem:[#allocation5 + $0x30] sm:$0xff]
    %v77 = vld [vmem:[#allocation5 + $0x38] sm:$0xff]
    %vm78 = vcmask 261120
    %v80 = vsel %vm78, %v69, 0
    %82 = vmatprep.subr.mxu0 %v71
    %83 = vmatpush1.msra.mxu0 %v70
    %84 = vmatprep.subr.mxu0 %v73
    %85 = vmatpush1.msra.mxu0 %v72
    %86 = vmatprep.subr.mxu0 %v75
    %87 = vmatpush1.msra.mxu0 %v74
    %88 = vmatprep.subr.mxu0 %v77
    %89 = vmatpush1.msra.mxu0 %v76
    %90 = vmatprep.subr.mxu0 0.0
    %91 = vmatpush1.msra.mxu0 0.0
    %92 = vmatprep.subr.mxu0 0.0
    %93 = vmatpush1.msra.mxu0 0.0
    %94 = vmatprep.subr.mxu0 0.0
    %95 = vmatpush1.msra.mxu0 0.0
    %96 = vmatprep.subr.mxu0 0.0
    %97 = vmatpush1.msra.mxu0 0.0
    %98 = vmatprep.subr.mxu0 0.0
    %99 = vmatpush1.msra.mxu0 0.0
    %100 = vmatprep.subr.mxu0 0.0
    %101 = vmatpush1.msra.mxu0 0.0
    %102 = vmatprep.subr.mxu0 0.0
    %103 = vmatpush1.msra.mxu0 0.0
    %104 = vmatprep.subr.mxu0 0.0
    %105 = vmatpush1.msra.mxu0 0.0
    %106 = vmatprep.subr.mxu0 0.0
    %107 = vmatpush1.msra.mxu0 0.0
    %108 = vmatprep.subr.mxu0 0.0
    %109 = vmatpush1.msra.mxu0 0.0
    %110 = vmatprep.subr.mxu0 0.0
    %111 = vmatpush1.msra.mxu0 0.0
    %112 = vmatprep.subr.mxu0 0.0
    %113 = vmatpush1.msra.mxu0 0.0
    %114 = vmatprep.subr.mxu0 0.0
    %115 = vmatpush1.msra.mxu0 0.0
    %116 = vmatprep.subr.mxu0 0.0
    %117 = vmatpush1.msra.mxu0 0.0
    %118 = vmatprep.subr.mxu0 0.0
    %119 = vmatpush1.msra.mxu0 0.0
    %120 = vmatprep.subr.mxu0 0.0
    %121 = vmatpush1.msra.mxu0 0.0
    %122 = vmatprep.subr.mxu0 0.0
    %123 = vmatpush1.msra.mxu0 0.0
    %124 = vmatprep.subr.mxu0 0.0
    %125 = vmatpush1.msra.mxu0 0.0
    %126 = vmatprep.subr.mxu0 0.0
    %127 = vmatpush1.msra.mxu0 0.0
    %128 = vmatprep.subr.mxu0 0.0
    %129 = vmatpush1.msra.mxu0 0.0
    %130 = vmatprep.subr.mxu0 0.0
    %131 = vmatpush1.msra.mxu0 0.0
    %132 = vmatprep.subr.mxu0 0.0
    %133 = vmatpush1.msra.mxu0 0.0
    %134 = vmatprep.subr.mxu0 0.0
    %135 = vmatpush1.msra.mxu0 0.0
    %136 = vmatprep.subr.mxu0 0.0
    %137 = vmatpush1.msra.mxu0 0.0
    %138 = vmatprep.subr.mxu0 0.0
    %139 = vmatpush1.msra.mxu0 0.0
    %140 = vmatprep.subr.mxu0 0.0
    %141 = vmatpush1.msra.mxu0 0.0
    %142 = vmatprep.subr.mxu0 0.0
    %143 = vmatpush1.msra.mxu0 0.0
    %144 = vmatprep.subr.mxu0 0.0
    %145 = vmatpush1.msra.mxu0 0.0
    %146 = vmatprep.mubr.f32.mxu0 0.0
    %147 = vmatmul.mubr.f32.gmra.mrb[0].mxu0 %v80
    %v148 = vpop.f32.mrb[0].mxu0
    %v149 = vadd.f32 0.0, %v148
    %v150 = vpop.f32.mrb[0].mxu0
    %v151 = vadd.f32 0.0, %v150
    %152 = vdwg.mxu0
    %v153 = vld [vmem:[#allocation8] ss:$8 sm:$0x3]
    %s154 = scalar_lea.vmem [#allocation8], 1
    %v155 = vld [vmem:[%s154] ss:$8 sm:$0x3]
    %v156 = vrot.slane %v149, 4
    %v157 = vadd.f32 %v149, %v156
    %v158 = vrot.slane %v157, 2
    %v159 = vadd.f32 %v157, %v158
    %v160 = vrot.slane %v159, 1
    %v161 = vadd.f32 %v159, %v160
    %v162 = vrot.slane %v151, 4
    %v163 = vadd.f32 %v151, %v162
    %v164 = vrot.slane %v163, 2
    %v165 = vadd.f32 %v163, %v164
    %v166 = vrot.slane %v165, 1
    %v167 = vadd.f32 %v165, %v166
    %v168 = vmul.f32 %v161, 0.125
    %v169 = vmul.f32 %v167, 0.125
    %v170 = vmul.f32 %v149, %v149
    %v171 = vmul.f32 %v151, %v151
    %v172 = vrot.slane %v170, 4
    %v173 = vadd.f32 %v170, %v172
    %v174 = vrot.slane %v173, 2
    %v175 = vadd.f32 %v173, %v174
    %v176 = vrot.slane %v175, 1
    %v177 = vadd.f32 %v175, %v176
    %v178 = vrot.slane %v171, 4
    %v179 = vadd.f32 %v171, %v178
    %v180 = vrot.slane %v179, 2
    %v181 = vadd.f32 %v179, %v180
    %v182 = vrot.slane %v181, 1
    %v183 = vadd.f32 %v181, %v182
    %v184 = vmul.f32 %v177, 0.125
    %v185 = vmul.f32 %v183, 0.125
    %v186 = vmul.f32 %v168, %v168
    %v187 = vmul.f32 %v169, %v169
    %v188 = vsub.f32 %v184, %v186
    %v189 = vsub.f32 %v185, %v187
    %v190 = vmax.f32 %v188, 0.0
    %v191 = vmax.f32 %v189, 0.0
    %v192 = vadd.f32 %v190, 1e-05
    %v193 = vadd.f32 %v191, 1e-05
    %v194 = vrsqrt.pop %v192
    %v195 = vrsqrt.pop %v193
    %v198 = vcombine.low %v194, %v195
    %v200 = vunpack.c.l.s4 1966171168
    %v201 = vunpack.c.0.s8 %v200
    %v202 = vlaneseq
    %v203 = vshrl.u32 %v202, 7
    %v204 = vsub.s32 %v201, %v203
    %v205 = vrot.slane %v198, %v204
    %v207 = vunpack.c.l.s4 1966171168
    %v208 = vunpack.c.0.s8 %v207
    %v209 = vlaneseq
    %v210 = vshrl.u32 %v209, 7
    %v211 = vsub.s32 %v208, %v210
    %v212 = vrot.slane %v205, %v211
    %v214 = vmul.f32 %v153, %v212
    %v216 = vlaneseq
    %v217 = vshrl.u32 %v216, 7
    %v218 = vsub.s32 0, %v217
    %v219 = vrot.slane %v214, %v218
    %v220 = vlaneseq
    %v221 = vshrl.u32 %v220, 7
    %v222 = vsub.s32 1, %v221
    %v223 = vrot.slane %v214, %v222
    %v226 = vmul.f32 %v168, %v219
    %v227 = vmul.f32 %v169, %v223
    %v230 = vcombine.low %v226, %v227
    %v232 = vunpack.c.l.s4 1966171168
    %v233 = vunpack.c.0.s8 %v232
    %v234 = vlaneseq
    %v235 = vshrl.u32 %v234, 7
    %v236 = vsub.s32 %v233, %v235
    %v237 = vrot.slane %v230, %v236
    %v239 = vunpack.c.l.s4 1966171168
    %v240 = vunpack.c.0.s8 %v239
    %v241 = vlaneseq
    %v242 = vshrl.u32 %v241, 7
    %v243 = vsub.s32 %v240, %v242
    %v244 = vrot.slane %v237, %v243
    %v246 = vsub.f32 %v155, %v244
    %v247 = vmul.f32 %v149, %v219
    %v248 = vmul.f32 %v151, %v223
    %v250 = vlaneseq
    %v251 = vshrl.u32 %v250, 7
    %v252 = vsub.s32 0, %v251
    %v253 = vrot.slane %v246, %v252
    %v254 = vlaneseq
    %v255 = vshrl.u32 %v254, 7
    %v256 = vsub.s32 1, %v255
    %v257 = vrot.slane %v246, %v256
    %v260 = vadd.f32 %v247, %v253
    %v261 = vadd.f32 %v248, %v257
    %v262 = vmax.f32 %v260, 0.0
    %v263 = vmax.f32 %v261, 0.0
    %v264 = vld [vmem:[#allocation7] sm:$0xff]
    %v265 = vld [vmem:[#allocation7 + $0x8] sm:$0xff]
    %v266 = vld [vmem:[#allocation7 + $0x10] sm:$0xff]
    %v267 = vld [vmem:[#allocation7 + $0x18] sm:$0xff]
    %v268 = vld [vmem:[#allocation7 + $0x20] sm:$0xff]
    %v269 = vld [vmem:[#allocation7 + $0x28] sm:$0xff]
    %v270 = vld [vmem:[#allocation7 + $0x30] sm:$0xff]
    %v271 = vld [vmem:[#allocation7 + $0x38] sm:$0xff]
    %v272 = vld [vmem:[#allocation7 + $0x40] sm:$0xff]
    %v273 = vld [vmem:[#allocation7 + $0x48] sm:$0xff]
    %v274 = vld [vmem:[#allocation7 + $0x50] sm:$0xff]
    %v275 = vld [vmem:[#allocation7 + $0x58] sm:$0xff]
    %v276 = vld [vmem:[#allocation7 + $0x60] sm:$0xff]
    %v277 = vld [vmem:[#allocation7 + $0x68] sm:$0xff]
    %v278 = vld [vmem:[#allocation7 + $0x70] sm:$0xff]
    %v279 = vld [vmem:[#allocation7 + $0x78] sm:$0xff]
    %v280 = vld [vmem:[#allocation7 + $0x80] sm:$0xff]
    %v281 = vld [vmem:[#allocation7 + $0x88] sm:$0xff]
    %v282 = vld [vmem:[#allocation7 + $0x90] sm:$0xff]
    %v283 = vld [vmem:[#allocation7 + $0x98] sm:$0xff]
    %v284 = vld [vmem:[#allocation7 + $0xa0] sm:$0xff]
    %v285 = vld [vmem:[#allocation7 + $0xa8] sm:$0xff]
    %v286 = vld [vmem:[#allocation7 + $0xb0] sm:$0xff]
    %v287 = vld [vmem:[#allocation7 + $0xb8] sm:$0xff]
    %v288 = vld [vmem:[#allocation7 + $0xc0] sm:$0xff]
    %v289 = vld [vmem:[#allocation7 + $0xc8] sm:$0xff]
    %v290 = vld [vmem:[#allocation7 + $0xd0] sm:$0xff]
    %v291 = vld [vmem:[#allocation7 + $0xd8] sm:$0xff]
    %v292 = vld [vmem:[#allocation7 + $0xe0] sm:$0xff]
    %v293 = vld [vmem:[#allocation7 + $0xe8] sm:$0xff]
    %v294 = vld [vmem:[#allocation7 + $0xf0] sm:$0xff]
    %v295 = vld [vmem:[#allocation7 + $0xf8] sm:$0xff]
    %296 = vmatprep.subr.mxu0 0.0
    %297 = vmatpush1.msra.mxu0 %v264
    %298 = vmatprep.subr.mxu0 0.0
    %299 = vmatpush1.msra.mxu0 %v265
    %300 = vmatprep.subr.mxu0 0.0
    %301 = vmatpush1.msra.mxu0 %v266
    %302 = vmatprep.subr.mxu0 0.0
    %303 = vmatpush1.msra.mxu0 %v267
    %304 = vmatprep.subr.mxu0 0.0
    %305 = vmatpush1.msra.mxu0 %v268
    %306 = vmatprep.subr.mxu0 0.0
    %307 = vmatpush1.msra.mxu0 %v269
    %308 = vmatprep.subr.mxu0 0.0
    %309 = vmatpush1.msra.mxu0 %v270
    %310 = vmatprep.subr.mxu0 0.0
    %311 = vmatpush1.msra.mxu0 %v271
    %312 = vmatprep.subr.mxu0 0.0
    %313 = vmatpush1.msra.mxu0 %v272
    %314 = vmatprep.subr.mxu0 0.0
    %315 = vmatpush1.msra.mxu0 %v273
    %316 = vmatprep.subr.mxu0 0.0
    %317 = vmatpush1.msra.mxu0 %v274
    %318 = vmatprep.subr.mxu0 0.0
    %319 = vmatpush1.msra.mxu0 %v275
    %320 = vmatprep.subr.mxu0 0.0
    %321 = vmatpush1.msra.mxu0 %v276
    %322 = vmatprep.subr.mxu0 0.0
    %323 = vmatpush1.msra.mxu0 %v277
    %324 = vmatprep.subr.mxu0 0.0
    %325 = vmatpush1.msra.mxu0 %v278
    %326 = vmatprep.subr.mxu0 0.0
    %327 = vmatpush1.msra.mxu0 %v279
    %328 = vmatprep.subr.mxu0 0.0
    %329 = vmatpush1.msra.mxu0 %v280
    %330 = vmatprep.subr.mxu0 0.0
    %331 = vmatpush1.msra.mxu0 %v281
    %332 = vmatprep.subr.mxu0 0.0
    %333 = vmatpush1.msra.mxu0 %v282
    %334 = vmatprep.subr.mxu0 0.0
    %335 = vmatpush1.msra.mxu0 %v283
    %336 = vmatprep.subr.mxu0 0.0
    %337 = vmatpush1.msra.mxu0 %v284
    %338 = vmatprep.subr.mxu0 0.0
    %339 = vmatpush1.msra.mxu0 %v285
    %340 = vmatprep.subr.mxu0 0.0
    %341 = vmatpush1.msra.mxu0 %v286
    %342 = vmatprep.subr.mxu0 0.0
    %343 = vmatpush1.msra.mxu0 %v287
    %344 = vmatprep.subr.mxu0 0.0
    %345 = vmatpush1.msra.mxu0 %v288
    %346 = vmatprep.subr.mxu0 0.0
    %347 = vmatpush1.msra.mxu0 %v289
    %348 = vmatprep.subr.mxu0 0.0
    %349 = vmatpush1.msra.mxu0 %v290
    %350 = vmatprep.subr.mxu0 0.0
    %351 = vmatpush1.msra.mxu0 %v291
    %352 = vmatprep.subr.mxu0 0.0
    %353 = vmatpush1.msra.mxu0 %v292
    %354 = vmatprep.subr.mxu0 0.0
    %355 = vmatpush1.msra.mxu0 %v293
    %356 = vmatprep.subr.mxu0 0.0
    %357 = vmatpush1.msra.mxu0 %v294
    %358 = vmatprep.subr.mxu0 0.0
    %359 = vmatpush1.msra.mxu0 %v295
    %360 = vmatprep.mubr.f32.mxu0 %v263
    %361 = vmatmul.mubr.f32.gmra.mrb[0].mxu0 %v262
    %v362 = vpop.f32.mrb[0].mxu0
    %v363 = vadd.f32 0.0, %v362
    %v364 = vpop.f32.mrb[0].mxu0
    %365 = vdwg.mxu0
    %v366 = vld [vmem:[#allocation8 + $0x2] ss:$0 sm:$0xff]
    %v367 = vld [vmem:[#allocation8 + $0x3] ss:$0 sm:$0xff]
    %v368 = vrot.slane %v363, 4
    %v369 = vadd.f32 %v363, %v368
    %v370 = vrot.slane %v369, 2
    %v371 = vadd.f32 %v369, %v370
    %v372 = vrot.slane %v371, 1
    %v373 = vadd.f32 %v371, %v372
    %v374 = vmul.f32 %v373, 0.125
    %v375 = vmul.f32 %v363, %v363
    %v376 = vrot.slane %v375, 4
    %v377 = vadd.f32 %v375, %v376
    %v378 = vrot.slane %v377, 2
    %v379 = vadd.f32 %v377, %v378
    %v380 = vrot.slane %v379, 1
    %v381 = vadd.f32 %v379, %v380
    %v382 = vmul.f32 %v381, 0.125
    %v383 = vmul.f32 %v374, %v374
    %v384 = vsub.f32 %v382, %v383
    %v385 = vmax.f32 %v384, 0.0
    %v386 = vadd.f32 %v385, 1e-05
    %v387 = vrsqrt.pop %v386
    %v388 = vmul.f32 %v366, %v387
    %v389 = vmul.f32 %v374, %v388
    %v390 = vsub.f32 %v367, %v389
    %v391 = vmul.f32 %v363, %v388
    %v392 = vadd.f32 %v391, %v390
    %v393 = vmax.f32 %v392, 0.0
    %v394 = vld [vmem:[#allocation7 + $0x100] sm:$0xff]
    %v395 = vld [vmem:[#allocation7 + $0x108] sm:$0xff]
    %v396 = vld [vmem:[#allocation7 + $0x110] sm:$0xff]
    %v397 = vld [vmem:[#allocation7 + $0x118] sm:$0xff]
    %v398 = vld [vmem:[#allocation7 + $0x120] sm:$0xff]
    %v399 = vld [vmem:[#allocation7 + $0x128] sm:$0xff]
    %v400 = vld [vmem:[#allocation7 + $0x130] sm:$0xff]
    %v401 = vld [vmem:[#allocation7 + $0x138] sm:$0xff]
    %v402 = vld [vmem:[#allocation7 + $0x140] sm:$0xff]
    %v403 = vld [vmem:[#allocation7 + $0x148] sm:$0xff]
    %v404 = vld [vmem:[#allocation7 + $0x150] sm:$0xff]
    %v405 = vld [vmem:[#allocation7 + $0x158] sm:$0xff]
    %v406 = vld [vmem:[#allocation7 + $0x160] sm:$0xff]
    %v407 = vld [vmem:[#allocation7 + $0x168] sm:$0xff]
    %v408 = vld [vmem:[#allocation7 + $0x170] sm:$0xff]
    %v409 = vld [vmem:[#allocation7 + $0x178] sm:$0xff]
    %v410 = vld [vmem:[#allocation8 + $0x4] ss:$0 sm:$0xff]
    %411 = vmatprep.subr.mxu0 0.0
    %412 = vmatpush1.msra.mxu0 %v394
    %413 = vmatprep.subr.mxu0 0.0
    %414 = vmatpush1.msra.mxu0 %v395
    %415 = vmatprep.subr.mxu0 0.0
    %416 = vmatpush1.msra.mxu0 %v396
    %417 = vmatprep.subr.mxu0 0.0
    %418 = vmatpush1.msra.mxu0 %v397
    %419 = vmatprep.subr.mxu0 0.0
    %420 = vmatpush1.msra.mxu0 %v398
    %421 = vmatprep.subr.mxu0 0.0
    %422 = vmatpush1.msra.mxu0 %v399
    %423 = vmatprep.subr.mxu0 0.0
    %424 = vmatpush1.msra.mxu0 %v400
    %425 = vmatprep.subr.mxu0 0.0
    %426 = vmatpush1.msra.mxu0 %v401
    %427 = vmatprep.subr.mxu0 0.0
    %428 = vmatpush1.msra.mxu0 %v402
    %429 = vmatprep.subr.mxu0 0.0
    %430 = vmatpush1.msra.mxu0 %v403
    %431 = vmatprep.subr.mxu0 0.0
    %432 = vmatpush1.msra.mxu0 %v404
    %433 = vmatprep.subr.mxu0 0.0
    %434 = vmatpush1.msra.mxu0 %v405
    %435 = vmatprep.subr.mxu0 0.0
    %436 = vmatpush1.msra.mxu0 %v406
    %437 = vmatprep.subr.mxu0 0.0
    %438 = vmatpush1.msra.mxu0 %v407
    %439 = vmatprep.subr.mxu0 0.0
    %440 = vmatpush1.msra.mxu0 %v408
    %441 = vmatprep.subr.mxu0 0.0
    %442 = vmatpush1.msra.mxu0 %v409
    %443 = vmatprep.subr.mxu0 0.0
    %444 = vmatpush1.msra.mxu0 0.0
    %445 = vmatprep.subr.mxu0 0.0
    %446 = vmatpush1.msra.mxu0 0.0
    %447 = vmatprep.subr.mxu0 0.0
    %448 = vmatpush1.msra.mxu0 0.0
    %449 = vmatprep.subr.mxu0 0.0
    %450 = vmatpush1.msra.mxu0 0.0
    %451 = vmatprep.subr.mxu0 0.0
    %452 = vmatpush1.msra.mxu0 0.0
    %453 = vmatprep.subr.mxu0 0.0
    %454 = vmatpush1.msra.mxu0 0.0
    %455 = vmatprep.subr.mxu0 0.0
    %456 = vmatpush1.msra.mxu0 0.0
    %457 = vmatprep.subr.mxu0 0.0
    %458 = vmatpush1.msra.mxu0 0.0
    %459 = vmatprep.subr.mxu0 0.0
    %460 = vmatpush1.msra.mxu0 0.0
    %461 = vmatprep.subr.mxu0 0.0
    %462 = vmatpush1.msra.mxu0 0.0
    %463 = vmatprep.subr.mxu0 0.0
    %464 = vmatpush1.msra.mxu0 0.0
    %465 = vmatprep.subr.mxu0 0.0
    %466 = vmatpush1.msra.mxu0 0.0
    %467 = vmatprep.subr.mxu0 0.0
    %468 = vmatpush1.msra.mxu0 0.0
    %469 = vmatprep.subr.mxu0 0.0
    %470 = vmatpush1.msra.mxu0 0.0
    %471 = vmatprep.subr.mxu0 0.0
    %472 = vmatpush1.msra.mxu0 0.0
    %473 = vmatprep.subr.mxu0 0.0
    %474 = vmatpush1.msra.mxu0 0.0
    %475 = vmatprep.mubr.f32.mxu0 0.0
    %476 = vmatmul.mubr.f32.gmra.mrb[0].mxu0 %v393
    %v477 = vpop.f32.mrb[0].mxu0
    %v478 = vadd.f32 %v410, %v477
    %v479 = vpop.f32.mrb[0].mxu0
    %480 = vdwg.mxu0
    %481 = vst [vmem:[#allocation10] sm:$0xff] %v478
    // Predicated region
    $region34: #{classifier_forward.1} parent=1 // pred_check
      _
    $region35: #{classifier_forward.1} parent=1 // pred_check_branch
      %483 = sbr.rel (0) target = $region37
    $region36: #{classifier_forward.1} parent=1 // pred_region
      %s485 = ssub.s32 128, 128
      %486 = vsyncadd [#allocation4], %s485
      %s488 = sshll.u32 [#allocation10], 4
      %s489 = int_to_ptr.vmem [resolvable:$true] %s488
      %491 = dma.vmem_to_hbm [thread:$0]  %s489, 128, %s4, [#allocation4]
    $region37: #{classifier_forward.1} parent=1 // pred_fallthru
      _
    // Predicated region
    $region38: #{classifier_forward.1} parent=1 // pred_check
      _
    $region39: #{classifier_forward.1} parent=1 // pred_check_branch
      %493 = sbr.rel (0) target = $region41
    $region40: #{classifier_forward.1} parent=1 // pred_region
      %494 = dma.done [#allocation4], 128
    $region41: #{classifier_forward.1} parent=1 // pred_fallthru
      _
    %495 = vsyncpa [#allocation3], 1
    %496 = vsyncpa [#allocation6], 1
    %497 = vsyncpa [#allocation9], 1
    %498 = vsyncpa [#allocation4], 1

</llo_original>
